<compile_context>
chip_gen: v5e
topology: v5e:2x2
jax: 0.10.0
libtpu: 0.0.40
codegen_flags: <defaults>
</compile_context>

<pallas_src>
import functools

import jax
import jax.numpy as jnp
from jax.experimental import pallas as pl
from jax.experimental.pallas import tpu as pltpu

TAU = 4       # MarkovNet window size (Linear(tau, 10))
HIDDEN = 10
OUT = 1


def mlp_kernel(x_ref, w1_ref, b1_ref, w2_ref, b2_ref, o_ref):
    """One lane-tile of the MLP.  Batch lives on the 128-lane axis.

    x_ref : (TAU, tl)      input tile (f32 or bf16; upcast here)
    w1_ref: (HIDDEN, TAU)  resident VMEM
    b1_ref: (HIDDEN, 1)    resident VMEM (broadcasts over lanes)
    w2_ref: (OUT, HIDDEN)  resident VMEM
    b2_ref: (OUT,)         scalar in SMEM
    o_ref : (OUT, tl)      lane-dense output tile
    """
    x = x_ref[...].astype(jnp.float32)
    h = jnp.dot(w1_ref[...], x, preferred_element_type=jnp.float32)   # (HIDDEN, tl)
    h = jnp.maximum(h + b1_ref[...], 0.0)                             # ReLU
    # Layer 2 stays on the MXU (memory-bound kernel; matches the XLA
    # reference numerics that were already validated at 1e-5).
    o = jnp.dot(w2_ref[...], h, preferred_element_type=jnp.float32)   # (OUT, tl)
    o_ref[...] = (o + b2_ref[0]).astype(o_ref.dtype)


def _round_up(a: int, b: int) -> int:
    return ((a + b - 1) // b) * b


def _choose_lane_tile(n: int, target: int) -> int:
    """Lane tile: multiple of 128, <= target, and small enough that large
    batches still give >= 4 grid steps (keeps both v7x TensorCores fed)."""
    n = max(int(n), 1)
    quarter = _round_up(pl.cdiv(n, 4), 128)
    return max(128, min(_round_up(int(target), 128), quarter, _round_up(n, 128)))


@functools.partial(jax.jit, static_argnames=("tl", "time_major", "out_dtype"))
def markov_net_forward(x, w1, b1, w2, b2, *, tl=16384, time_major=False,
                       out_dtype=jnp.float32):
    """MarkovNet forward: Linear(TAU->HIDDEN) -> ReLU -> Linear(HIDDEN->OUT).

    x : (N, TAU), or (TAU, N) when time_major=True (skips the transpose pass).
        May be f32 or bf16 (bf16 halves HBM traffic; accumulation stays f32).
    w1: (HIDDEN, TAU), b1: (HIDDEN,), w2: (OUT, HIDDEN), b2: (OUT,)
        (PyTorch nn.Linear layouts).  Returns (N, OUT) in out_dtype.
    """
    xt = x if time_major else x.T            # (TAU, N); transpose fusible into kernel
    tau, n = xt.shape
    assert tau == TAU, xt.shape

    tl_eff = _choose_lane_tile(n, tl)
    grid = (pl.cdiv(n, tl_eff),)             # ragged last block -> no jnp.pad pass

    w1f = w1.astype(jnp.float32)                      # (HIDDEN, TAU)
    b1c = b1.astype(jnp.float32).reshape(HIDDEN, 1)   # hidden bias -> sublanes
    w2f = w2.astype(jnp.float32)                      # (OUT, HIDDEN)
    b2s = b2.astype(jnp.float32).reshape(OUT)         # (1,) scalar for SMEM

    cost = pl.CostEstimate(
        flops=2 * n * (TAU * HIDDEN + HIDDEN * OUT),
        transcendentals=0,
        bytes_accessed=int(xt.size * xt.dtype.itemsize
                           + 4 * (w1f.size + b1c.size + w2f.size + b2s.size)
                           + n * OUT * jnp.dtype(out_dtype).itemsize),
    )

    out = pl.pallas_call(
        mlp_kernel,
        out_shape=jax.ShapeDtypeStruct((OUT, n), out_dtype),
        grid_spec=pltpu.PrefetchScalarGridSpec(
            num_scalar_prefetch=0,
            grid=grid,
            in_specs=[
                # x: the only pipelined (double-buffered) operand.
                pl.BlockSpec((TAU, tl_eff), lambda i: (0, i)),
                # Weights/bias: whole-array VMEM residents, no per-step DMA.
                pl.BlockSpec(memory_space=pltpu.MemorySpace.VMEM),   # W1
                pl.BlockSpec(memory_space=pltpu.MemorySpace.VMEM),   # b1
                pl.BlockSpec(memory_space=pltpu.MemorySpace.VMEM),   # W2
                pl.BlockSpec(memory_space=pltpu.MemorySpace.SMEM),   # b2 scalar
            ],
            out_specs=pl.BlockSpec((OUT, tl_eff), lambda i: (0, i)),
        ),
        compiler_params=pltpu.CompilerParams(
            dimension_semantics=("parallel",),
            # Explicit, modest limit: safe on v7x (64 MiB physical VMEM) and
            # far above the ~1 MiB this kernel actually needs at tl=16K.
            vmem_limit_bytes=32 * 1024 * 1024,
            # Allow XLA to fuse the wrapper-side transpose (operand 0) into
            # the pallas_call instead of materialising a second x in HBM.
            allow_input_fusion=[True, False, False, False, False],
        ),
        cost_estimate=cost,
    )(xt, w1f, b1c, w2f, b2s)

    return out.T                               # (N, OUT)


if __name__ == "__main__":
    key = jax.random.PRNGKey(0)
    k_x, k_w1, k_b1, k_w2, k_b2 = jax.random.split(key, 5)

    # PyTorch nn.Linear parameter layouts: (out, in) weights, (out,) biases.
    w1 = jax.random.normal(k_w1, (HIDDEN, TAU), dtype=jnp.float32) * 0.1
    b1 = jax.random.normal(k_b1, (HIDDEN,), dtype=jnp.float32) * 0.1
    w2 = jax.random.normal(k_w2, (OUT, HIDDEN), dtype=jnp.float32) * 0.1
    b2 = jax.random.normal(k_b2, (OUT,), dtype=jnp.float32) * 0.1

    def reference(x):
        return jnp.maximum(x @ w1.T + b1, 0.0) @ w2.T + b2

    # n=1000: multi-step "parallel" grid with a ragged last block.
    # n=8   : single partial 128-lane block (no padding pass anywhere).
    for n in (1000, 8):
        x = jax.random.normal(k_x, (n, TAU), dtype=jnp.float32)
        out = jax.block_until_ready(markov_net_forward(x, w1, b1, w2, b2))
        ref = reference(x)
        assert out.shape == (n, OUT), out.shape
        assert jnp.allclose(out, ref, atol=1e-5, rtol=1e-5), float(
            jnp.max(jnp.abs(out - ref)))

    # bf16 input path (upcast in-kernel, f32 accumulation): ~1.6x less HBM
    # traffic for the dominant operand.  Compare against the f32 reference
    # evaluated on the bf16-rounded inputs.
    xb = jax.random.normal(k_x, (1000, TAU), dtype=jnp.float32).astype(jnp.bfloat16)
    out_b = jax.block_until_ready(markov_net_forward(xb, w1, b1, w2, b2))
    ref_b = reference(xb.astype(jnp.float32))
    assert jnp.allclose(out_b, ref_b, atol=1e-5, rtol=1e-5), float(
        jnp.max(jnp.abs(out_b - ref_b)))

    # Time-major caller path: producer hands over (TAU, N) directly, so the
    # wrapper does no transpose pass at all.
    x_tm = jax.random.normal(k_x, (300, TAU), dtype=jnp.float32)
    out_tm = jax.block_until_ready(
        markov_net_forward(x_tm.T, w1, b1, w2, b2, time_major=True))
    assert jnp.allclose(out_tm, reference(x_tm), atol=1e-5, rtol=1e-5)

    print("KERNEL_OK")
</pallas_src>

<mosaic_0001>
module attributes {stable_mosaic.version = 11 : i64} {
  func.func @mlp_kernel(%arg0: i32, %arg1: memref<4x256xf32, #tpu.memory_space<vmem>>, %arg2: memref<10x4xf32, #tpu.memory_space<vmem>>, %arg3: memref<10x1xf32, #tpu.memory_space<vmem>>, %arg4: memref<1x10xf32, #tpu.memory_space<vmem>>, %arg5: memref<1xf32, #tpu.memory_space<smem>>, %arg6: memref<1x256xf32, #tpu.memory_space<vmem>>) attributes {dimension_semantics = [#tpu.dimension_semantics<parallel>], iteration_bounds = array<i64: 4>, scalar_prefetch = 0 : i64, scratch_operands = 0 : i64, tpu.core_type = #tpu.core_type<tc>, window_params = [{transform_indices = @transform_0, window_bounds = array<i64: 4, 256>}, {pipeline_mode = #tpu.pipeline_mode<synchronous>, transform_indices = @transform_1, window_bounds = array<i64: 10, 4>}, {pipeline_mode = #tpu.pipeline_mode<synchronous>, transform_indices = @transform_2, window_bounds = array<i64: 10, 1>}, {pipeline_mode = #tpu.pipeline_mode<synchronous>, transform_indices = @transform_3, window_bounds = array<i64: 1, 10>}, {transform_indices = @transform_4, window_bounds = array<i64: 1>}, {transform_indices = @transform_5, window_bounds = array<i64: 1, 256>}]} {
    %c0 = arith.constant 0 : index
    %c0_0 = arith.constant 0 : index
    %0 = vector.load %arg1[%c0, %c0_0] : memref<4x256xf32, #tpu.memory_space<vmem>>, vector<4x256xf32>
    %c0_1 = arith.constant 0 : index
    %c0_2 = arith.constant 0 : index
    %1 = vector.load %arg2[%c0_1, %c0_2] : memref<10x4xf32, #tpu.memory_space<vmem>>, vector<10x4xf32>
    %cst = arith.constant dense<0.000000e+00> : vector<10x256xf32>
    %2 = tpu.matmul %1, %0, %cst {dimension_numbers = #tpu.dot_dimension_numbers<[1], [0], [0], [1], [0, 0, 1, 1], [], []>} : vector<10x4xf32>, vector<4x256xf32>, vector<10x256xf32> -> vector<10x256xf32>
    %c0_3 = arith.constant 0 : index
    %c0_4 = arith.constant 0 : index
    %3 = vector.load %arg3[%c0_3, %c0_4] : memref<10x1xf32, #tpu.memory_space<vmem>>, vector<10x1xf32>
    %4 = vector.broadcast %3 : vector<10x1xf32> to vector<10x256xf32>
    %5 = arith.addf %2, %4 : vector<10x256xf32>
    %cst_5 = arith.constant 0.000000e+00 : f32
    %6 = vector.broadcast %cst_5 : f32 to vector<10x256xf32>
    %7 = arith.maximumf %5, %6 : vector<10x256xf32>
    %c0_6 = arith.constant 0 : index
    %c0_7 = arith.constant 0 : index
    %8 = vector.load %arg4[%c0_6, %c0_7] : memref<1x10xf32, #tpu.memory_space<vmem>>, vector<1x10xf32>
    %cst_8 = arith.constant dense<0.000000e+00> : vector<1x256xf32>
    %9 = tpu.matmul %8, %7, %cst_8 {dimension_numbers = #tpu.dot_dimension_numbers<[1], [0], [0], [1], [0, 0, 1, 1], [], []>} : vector<1x10xf32>, vector<10x256xf32>, vector<1x256xf32> -> vector<1x256xf32>
    %c0_9 = arith.constant 0 : index
    %10 = memref.load %arg5[%c0_9] : memref<1xf32, #tpu.memory_space<smem>>
    %11 = vector.broadcast %10 : f32 to vector<1x256xf32>
    %12 = arith.addf %9, %11 : vector<1x256xf32>
    %c0_10 = arith.constant 0 : index
    %c0_11 = arith.constant 0 : index
    %13 = vector.load %arg6[%c0_10, %c0_11] : memref<1x256xf32, #tpu.memory_space<vmem>>, vector<1x256xf32>
    tpu.vector_store %arg6[%c0_10, %c0_11], %12 {strides = array<i32>} : memref<1x256xf32, #tpu.memory_space<vmem>>, vector<1x256xf32>,
    return
  }
  func.func @transform_0(%arg0: i32) -> (i32, i32) {
    %c0_i32 = arith.constant 0 : i32
    %c0_i32_0 = arith.constant 0 : i32
    return %c0_i32, %arg0 : i32, i32
  }
  func.func @transform_1(%arg0: i32) -> (i32, i32) {
    %c0_i32 = arith.constant 0 : i32
    %c0_i32_0 = arith.constant 0 : i32
    %c0_i32_1 = arith.constant 0 : i32
    return %c0_i32, %c0_i32_0 : i32, i32
  }
  func.func @transform_2(%arg0: i32) -> (i32, i32) {
    %c0_i32 = arith.constant 0 : i32
    %c0_i32_0 = arith.constant 0 : i32
    %c0_i32_1 = arith.constant 0 : i32
    return %c0_i32, %c0_i32_0 : i32, i32
  }
  func.func @transform_3(%arg0: i32) -> (i32, i32) {
    %c0_i32 = arith.constant 0 : i32
    %c0_i32_0 = arith.constant 0 : i32
    %c0_i32_1 = arith.constant 0 : i32
    return %c0_i32, %c0_i32_0 : i32, i32
  }
  func.func @transform_4(%arg0: i32) -> i32 {
    %c0_i32 = arith.constant 0 : i32
    %c0_i32_0 = arith.constant 0 : i32
    return %c0_i32 : i32
  }
  func.func @transform_5(%arg0: i32) -> (i32, i32) {
    %c0_i32 = arith.constant 0 : i32
    %c0_i32_0 = arith.constant 0 : i32
    return %c0_i32, %arg0 : i32, i32
  }
}

</mosaic_0001>

<llo_original>
// kernel: markov_net_forward.2
$region0: #{markov_net_forward.2}
  #allocation0 [shape = 'u32[]', space=smem, size = 0x4, offset = 0x4, fixed_abs, tag = 'smem constant byte address 0x4 - core index']
  #allocation1 [shape = 'u32[72,128]{1,0:T(1,128)}', space=vmem, size = 0x9000, scoped, tag = 'internal scratch']
  #allocation2 [shape = 'f32[1]{0:T(128)S(6)}', space=smem, size = 0x200, scoped, tag = 'scoped memory for markov_net_forward.2']
  %s0 = inlined_call_operand.vmem [shape: f32[10,4], index: 0, kind: input, shape index: {}]
  %s1 = inlined_call_operand.vmem [shape: f32[10,1], index: 1, kind: input, shape index: {}]
  %s2 = inlined_call_operand.vmem [shape: f32[1,10], index: 2, kind: input, shape index: {}]
  %s3 = inlined_call_operand.<no memory space> [shape: f32[1], index: 3, kind: input, shape index: {}]
  %s4 = inlined_call_operand.vmem [shape: f32[1000,4], index: 4, kind: input, shape index: {}]
  %s5 = inlined_call_operand.hbm [shape: f32[1,1000], index: 5, kind: output, shape index: {}]
  %s6 = sld [smem:[#allocation0]]
  $region53: #{markov_net_forward.2} parent=0
    _
  %s8 = ssub.s32 1, %s6
  %s9 = scalar_select 0, %s8, %s6
  %10 = sst [smem:[#allocation2]] %s3
  $region1: #{markov_net_forward.2} parent=0
    #allocation3 [shape = 'u8[2048]{0}', space=vmem, size = 0x800, scoped, tag = 'output window, operand 0']
    #allocation4 [shape = 's32[2]{0}', space=sflag, size = 0x8, scoped, tag = 'scoped memory for markov_net_forward.2']
    %11 = vsyncpa [#allocation4], 0
    %s12 = scalar_lea.sflag [#allocation4], 1
    %13 = vsyncpa %s12, 0
    loop: start=0, step=1, limit=6
    $region2: #{markov_net_forward.2} parent=1 // loop_pre_header
      _
    $region3: #{markov_net_forward.2} parent=1 // loop_header
      %s15 = sphi 0, %s19
      %p16 = scmp.ge.s32.totalorder %s15, 6
      %s25 = sphi 0, %s27
      %s28 = sphi 0, %s25
      %s29 = sphi 0, %s28
      %s45 = sphi 0, %s29
      %s49 = sphi 0, %s49
      %s51 = sphi 0, %s49
      %s52 = sphi 0, %s51
      %s66 = sphi 0, %s52
      %s70 = sphi 0, %s70
      %s72 = sphi 0, %s70
      %s73 = sphi 0, %s72
      %s87 = sphi 0, %s73
      %s91 = sphi 0, %s91
      %s93 = sphi 0, %s91
      %s94 = sphi 0, %s93
      %s108 = sphi 0, %s94
      %s112 = sphi 0, %s112
      %s114 = sphi 0, %s112
      %s115 = sphi 0, %s114
      %s129 = sphi 0, %s115
      %s135 = sphi 0, %s137
      %s138 = sphi 0, %s135
      %s139 = sphi 0, %s138
      %s155 = sphi 0, %s139
    $region4: #{markov_net_forward.2} parent=1 // loop_header_branch
      %18 = sbr.rel (%p16) target = $region8
    $region5: #{markov_net_forward.2} parent=1 // loop_body
      %s20 = ssub.s32 %s15, 1
      %s21 = ssub.s32 %s15, 2
      %s22 = sadd.s32 %s15, 1
      %s23 = ssub.s32 %s15, %s22
      %p24 = scmp.eq.s32.totalorder %s23, 0
      %s26 = sadd.s32 %s25, 1
      %s27 = scalar_select %p24, %s25, %s26
      %p30 = pneg %p24
      %p31 = scmp.eq.s32.totalorder %s15, 3
      %p32 = por %p30, %p31
      %p33 = scmp.ne.s32.totalorder %s25, %s28
      %p34 = scmp.eq.s32.totalorder %s15, 0
      %p35 = por %p33, %p34
      %p36 = scmp.ne.s32.totalorder %s25, %s28
      %p37 = scmp.eq.s32.totalorder %s20, 3
      %p38 = por %p36, %p37
      %p39 = scmp.ne.s32.totalorder %s28, %s29
      %p40 = scmp.eq.s32.totalorder %s20, 0
      %p41 = por %p39, %p40
      %p42 = scmp.ne.s32.totalorder %s28, %s29
      %p43 = scmp.eq.s32.totalorder %s21, 3
      %p44 = por %p42, %p43
      %p46 = scmp.ne.s32.totalorder %s29, %s45
      %p47 = scmp.eq.s32.totalorder %s21, 0
      %p48 = por %p46, %p47
      %s50 = sadd.s32 %s49, 1
      %p53 = scmp.eq.s32.totalorder %s15, 3
      %p54 = scmp.ne.s32.totalorder %s49, %s51
      %p55 = scmp.eq.s32.totalorder %s15, 0
      %p56 = por %p54, %p55
      %p57 = scmp.ne.s32.totalorder %s49, %s51
      %p58 = scmp.eq.s32.totalorder %s20, 3
      %p59 = por %p57, %p58
      %p60 = scmp.ne.s32.totalorder %s51, %s52
      %p61 = scmp.eq.s32.totalorder %s20, 0
      %p62 = por %p60, %p61
      %p63 = scmp.ne.s32.totalorder %s51, %s52
      %p64 = scmp.eq.s32.totalorder %s21, 3
      %p65 = por %p63, %p64
      %p67 = scmp.ne.s32.totalorder %s52, %s66
      %p68 = scmp.eq.s32.totalorder %s21, 0
      %p69 = por %p67, %p68
      %s71 = sadd.s32 %s70, 1
      %p74 = scmp.eq.s32.totalorder %s15, 3
      %p75 = scmp.ne.s32.totalorder %s70, %s72
      %p76 = scmp.eq.s32.totalorder %s15, 0
      %p77 = por %p75, %p76
      %p78 = scmp.ne.s32.totalorder %s70, %s72
      %p79 = scmp.eq.s32.totalorder %s20, 3
      %p80 = por %p78, %p79
      %p81 = scmp.ne.s32.totalorder %s72, %s73
      %p82 = scmp.eq.s32.totalorder %s20, 0
      %p83 = por %p81, %p82
      %p84 = scmp.ne.s32.totalorder %s72, %s73
      %p85 = scmp.eq.s32.totalorder %s21, 3
      %p86 = por %p84, %p85
      %p88 = scmp.ne.s32.totalorder %s73, %s87
      %p89 = scmp.eq.s32.totalorder %s21, 0
      %p90 = por %p88, %p89
      %s92 = sadd.s32 %s91, 1
      %p95 = scmp.eq.s32.totalorder %s15, 3
      %p96 = scmp.ne.s32.totalorder %s91, %s93
      %p97 = scmp.eq.s32.totalorder %s15, 0
      %p98 = por %p96, %p97
      %p99 = scmp.ne.s32.totalorder %s91, %s93
      %p100 = scmp.eq.s32.totalorder %s20, 3
      %p101 = por %p99, %p100
      %p102 = scmp.ne.s32.totalorder %s93, %s94
      %p103 = scmp.eq.s32.totalorder %s20, 0
      %p104 = por %p102, %p103
      %p105 = scmp.ne.s32.totalorder %s93, %s94
      %p106 = scmp.eq.s32.totalorder %s21, 3
      %p107 = por %p105, %p106
      %p109 = scmp.ne.s32.totalorder %s94, %s108
      %p110 = scmp.eq.s32.totalorder %s21, 0
      %p111 = por %p109, %p110
      %s113 = sadd.s32 %s112, 1
      %p116 = scmp.eq.s32.totalorder %s15, 3
      %p117 = scmp.ne.s32.totalorder %s112, %s114
      %p118 = scmp.eq.s32.totalorder %s15, 0
      %p119 = por %p117, %p118
      %p120 = scmp.ne.s32.totalorder %s112, %s114
      %p121 = scmp.eq.s32.totalorder %s20, 3
      %p122 = por %p120, %p121
      %p123 = scmp.ne.s32.totalorder %s114, %s115
      %p124 = scmp.eq.s32.totalorder %s20, 0
      %p125 = por %p123, %p124
      %p126 = scmp.ne.s32.totalorder %s114, %s115
      %p127 = scmp.eq.s32.totalorder %s21, 3
      %p128 = por %p126, %p127
      %p130 = scmp.ne.s32.totalorder %s115, %s129
      %p131 = scmp.eq.s32.totalorder %s21, 0
      %p132 = por %p130, %p131
      %s133 = ssub.s32 %s15, %s22
      %p134 = scmp.eq.s32.totalorder %s133, 0
      %s136 = sadd.s32 %s135, 1
      %s137 = scalar_select %p134, %s135, %s136
      %p140 = pneg %p134
      %p141 = scmp.eq.s32.totalorder %s15, 3
      %p142 = por %p140, %p141
      %p143 = scmp.ne.s32.totalorder %s135, %s138
      %p144 = scmp.eq.s32.totalorder %s15, 0
      %p145 = por %p143, %p144
      %p146 = scmp.ne.s32.totalorder %s135, %s138
      %p147 = scmp.eq.s32.totalorder %s20, 3
      %p148 = por %p146, %p147
      %p149 = scmp.ne.s32.totalorder %s138, %s139
      %p150 = scmp.eq.s32.totalorder %s20, 0
      %p151 = por %p149, %p150
      %p152 = scmp.ne.s32.totalorder %s138, %s139
      %p153 = scmp.eq.s32.totalorder %s21, 3
      %p154 = por %p152, %p153
      %p156 = scmp.ne.s32.totalorder %s139, %s155
      %p157 = scmp.eq.s32.totalorder %s21, 0
      %p158 = por %p156, %p157
      %p159 = scmp.le.s32.totalorder 1, %s15
      %p160 = scmp.lt.s32.totalorder %s15, 5
      %p161 = pnand %p159, %p160
      %p162 = pneg %p161
      // Predicated region
      $region9: #{markov_net_forward.2} parent=5 // pred_check
        _
      $region10: #{markov_net_forward.2} parent=5 // pred_check_branch
        %164 = sbr.rel (%p161) target = $region12
      $region11: #{markov_net_forward.2} parent=5 // pred_region
        %s165 = ssub.s32 %s15, 1
        // Predicated region
        $region13: #{markov_net_forward.2} parent=11 // pred_check
          %p166 = pneg %p62
        $region14: #{markov_net_forward.2} parent=11 // pred_check_branch
          %168 = sbr.rel (%p166) target = $region16
        $region15: #{markov_net_forward.2} parent=11 // pred_region
          _
        $region16: #{markov_net_forward.2} parent=11 // pred_fallthru
          _
        // Predicated region
        $region17: #{markov_net_forward.2} parent=11 // pred_check
          %p169 = pneg %p83
        $region18: #{markov_net_forward.2} parent=11 // pred_check_branch
          %171 = sbr.rel (%p169) target = $region20
        $region19: #{markov_net_forward.2} parent=11 // pred_region
          _
        $region20: #{markov_net_forward.2} parent=11 // pred_fallthru
          _
        // Predicated region
        $region21: #{markov_net_forward.2} parent=11 // pred_check
          %p172 = pneg %p104
        $region22: #{markov_net_forward.2} parent=11 // pred_check_branch
          %174 = sbr.rel (%p172) target = $region24
        $region23: #{markov_net_forward.2} parent=11 // pred_region
          _
        $region24: #{markov_net_forward.2} parent=11 // pred_fallthru
          _
        // Predicated region
        $region25: #{markov_net_forward.2} parent=11 // pred_check
          %p175 = pneg %p125
        $region26: #{markov_net_forward.2} parent=11 // pred_check_branch
          %177 = sbr.rel (%p175) target = $region28
        $region27: #{markov_net_forward.2} parent=11 // pred_region
          _
        $region28: #{markov_net_forward.2} parent=11 // pred_fallthru
          _
      $region12: #{markov_net_forward.2} parent=5 // pred_fallthru
        _
      %p178 = scmp.lt.s32.totalorder %s15, 4
      // Predicated region
      $region29: #{markov_net_forward.2} parent=5 // pred_check
        %p179 = pneg %p178
      $region30: #{markov_net_forward.2} parent=5 // pred_check_branch
        %181 = sbr.rel (%p179) target = $region32
      $region31: #{markov_net_forward.2} parent=5 // pred_region
        // Predicated region
        $region33: #{markov_net_forward.2} parent=31 // pred_check
          %p182 = pneg %p35
        $region34: #{markov_net_forward.2} parent=31 // pred_check_branch
          %184 = sbr.rel (%p182) target = $region36
        $region35: #{markov_net_forward.2} parent=31 // pred_region
          %s185 = smul.u32 2, %s15
          %p186 = scmp.lt.s32.totalorder %s185, 7
          %s187 = scalar_select %p186, %s185, 7
          %s188 = smul.addr %s187, 4
          %s189 = scalar_lea.vmem %s4, %s188
          %s190 = smul.u32 2, %s15
        $region36: #{markov_net_forward.2} parent=31 // pred_fallthru
          _
      $region32: #{markov_net_forward.2} parent=5 // pred_fallthru
        _
      %p191 = scmp.le.s32.totalorder 1, %s15
      %p192 = scmp.lt.s32.totalorder %s15, 5
      %p193 = pnand %p191, %p192
      %p194 = pneg %p193
      // Predicated region
      $region37: #{markov_net_forward.2} parent=5 // pred_check
        _
      $region38: #{markov_net_forward.2} parent=5 // pred_check_branch
        %196 = sbr.rel (%p193) target = $region40
      $region39: #{markov_net_forward.2} parent=5 // pred_region
        #allocation5 [shape = 'u8[4096]{0}', space=vmem, size = 0x1000, dematerialized = true, scoped, tag = 'FusionAdapter Buffer %fusion.1 = f32[4,1000]{1,0:T(4,128)} fusion(%param_4.1), kind=kLoop, calls=%fused_computation.1.clone, metadata={op_name="jit(markov_net_forward)/transpose" stack_frame_id=7}']
        %s197 = ssub.s32 %s15, 1
        %s198 = smul.u32 2, %s20
        %p199 = scmp.lt.s32.totalorder %s198, 7
        %s200 = scalar_select %p199, %s198, 7
        %s201 = smul.addr %s200, 4
        %s202 = scalar_lea.vmem %s4, %s201
        %p203 = pneg %p41
        %p204 = pneg %p38
        %p205 = pneg %p62
        %p206 = pneg %p59
        %p207 = pneg %p83
        %p208 = pneg %p80
        %p209 = pneg %p104
        %p210 = pneg %p101
        %p211 = pneg %p125
        %p212 = pneg %p122
        %p213 = pneg %p151
        %p214 = pneg %p148
        %s215 = sand.u32 %s138, 1
        %s216 = scalar_lea.sflag [#allocation4], %s215
        %s217 = sand.u32 %s138, 1
        %s218 = smul.addr %s217, 2
        %s219 = scalar_lea.vmem [#allocation3], %s218
        %s220 = smul.u32 2, %s20
        %p221 = scmp.lt.s32.totalorder %s220, 7
        %s222 = scalar_select %p221, %s220, 7
        %s223 = smul.addr %s222, 4
        %s224 = scalar_lea.vmem %s4, %s223
        %s225 = smul.u32 2, %s20
        %s226 = smul.u32 2, %s20
        %v227 = vld [vmem:[%s224] sm:$0xf]
        %s229 = ssub.s32 16, 1
        %230 = vst [vmem:[#allocation5] sm:%s229] %v227
        %s231 = scalar_lea.vmem %s224, 4
        %v232 = vld [vmem:[%s231] sm:$0xf]
        %s233 = scalar_lea.vmem [#allocation5], 4
        %s235 = ssub.s32 16, 1
        %236 = vst [vmem:[%s233] sm:%s235] %v232
        %v237 = vld [vmem:[#allocation5] sm:$0xff]
        %v238 = vld [vmem:[%s0] sm:$0xff]
        %v239 = vld [vmem:[%s0 + $0x8] sm:$0x3]
        %v240 = vld [vmem:[%s1] sm:$0xff]
        %v241 = vld [vmem:[%s1 + $0x8] sm:$0x3]
        %243 = vset.pattern.permute.xlu0 0
        %244 = vperm.xlu0 %243, %v240
        %v245 = vpop.permute.xlu0 %244
        %248 = vset.pattern.permute.xlu0 0
        %249 = vperm.xlu0 %248, %v241
        %v250 = vpop.permute.xlu0 %249
        %253 = vst [vmem:[#allocation1] ss:$2 sm:$0xff] %v237
        %v254 = vld.sshfl [vmem:[#allocation1] sm:$0xff pattern:$0x75316420]
        %v255 = vld.sshfl [vmem:[#allocation1 + $0x8] sm:$0xff pattern:$0x75316420]
        %vm256 = vcmask 31744
        %v258 = vsel %vm256, %v238, 0
        %v261 = vsel %vm256, %v239, 0
        %vm263 = vcmask 1043456
        %v264 = vsel %vm263, %v254, 0
        %v266 = vsel %vm263, %v255, 0
        %268 = vmatpush.msra.mxu0 0.0
        %269 = vmatpush.msra.mxu0 0.0
        %270 = vmatpush.msra.mxu0 0.0
        %271 = vmatpush.msra.mxu0 0.0
        %272 = vmatpush.msra.mxu0 0.0
        %273 = vmatpush.msra.mxu0 0.0
        %274 = vmatpush.msra.mxu0 0.0
        %275 = vmatpush.msra.mxu0 0.0
        %276 = vmatpush.msra.mxu0 0.0
        %277 = vmatpush.msra.mxu0 0.0
        %278 = vmatpush.msra.mxu0 0.0
        %279 = vmatpush.msra.mxu0 0.0
        %280 = vmatpush.msra.mxu0 0.0
        %281 = vmatpush.msra.mxu0 0.0
        %282 = vmatpush.msra.mxu0 0.0
        %283 = vmatpush.msra.mxu0 %v264
        %284 = vmatmul.f32.gmra.mxu0 %v258
        %v285 = vpop.f32.mrf.mxu0
        %v286 = vadd.f32 %v245, %v285
        %287 = vmatmul.f32.gmra.mxu0 %v261
        %v288 = vpop.f32.mrf.mxu0
        %v289 = vadd.f32 %v250, %v288
        %290 = vdwg.mxu0
        %291 = vmatpush.msra.mxu0 0.0
        %292 = vmatpush.msra.mxu0 0.0
        %293 = vmatpush.msra.mxu0 0.0
        %294 = vmatpush.msra.mxu0 0.0
        %295 = vmatpush.msra.mxu0 0.0
        %296 = vmatpush.msra.mxu0 0.0
        %297 = vmatpush.msra.mxu0 0.0
        %298 = vmatpush.msra.mxu0 0.0
        %299 = vmatpush.msra.mxu0 0.0
        %300 = vmatpush.msra.mxu0 0.0
        %301 = vmatpush.msra.mxu0 0.0
        %302 = vmatpush.msra.mxu0 0.0
        %303 = vmatpush.msra.mxu0 0.0
        %304 = vmatpush.msra.mxu0 0.0
        %305 = vmatpush.msra.mxu0 0.0
        %306 = vmatpush.msra.mxu0 %v266
        %307 = vmatmul.f32.gmra.mxu0 %v258
        %v308 = vpop.f32.mrf.mxu0
        %v309 = vadd.f32 %v245, %v308
        %310 = vmatmul.f32.gmra.mxu0 %v261
        %v311 = vpop.f32.mrf.mxu0
        %v312 = vadd.f32 %v250, %v311
        %313 = vdwg.mxu0
        %v314 = vmax.f32 %v286, 0.0
        %v315 = vmax.f32 %v309, 0.0
        %v316 = vmax.f32 %v289, 0.0
        %v317 = vmax.f32 %v312, 0.0
        %v318 = vld [vmem:[%s2] sm:$0x1]
        %s319 = sld [smem:[#allocation2]]
        %v320 = vstv %s319
        %vm321 = vcmask 80896
        %v323 = vsel %vm321, %v318, 0
        %vm325 = vcmask 1041408
        %v327 = vsel %vm325, %v316, 0
        %v330 = vsel %vm325, %v317, 0
        %332 = vmatpush.msra.mxu0 0.0
        %333 = vmatpush.msra.mxu0 0.0
        %334 = vmatpush.msra.mxu0 0.0
        %335 = vmatpush.msra.mxu0 0.0
        %336 = vmatpush.msra.mxu0 0.0
        %337 = vmatpush.msra.mxu0 0.0
        %338 = vmatpush.msra.mxu0 0.0
        %339 = vmatpush.msra.mxu0 0.0
        %340 = vmatpush.msra.mxu0 0.0
        %341 = vmatpush.msra.mxu0 0.0
        %342 = vmatpush.msra.mxu0 0.0
        %343 = vmatpush.msra.mxu0 0.0
        %344 = vmatpush.msra.mxu0 0.0
        %345 = vmatpush.msra.mxu0 0.0
        %346 = vmatpush.msra.mxu0 %v327
        %347 = vmatpush.msra.mxu0 %v314
        %348 = vmatmul.f32.gmra.mxu0 %v323
        %v349 = vpop.f32.mrf.mxu0
        %v350 = vadd.f32 %v320, %v349
        %351 = vdwg.mxu0
        %352 = vmatpush.msra.mxu0 0.0
        %353 = vmatpush.msra.mxu0 0.0
        %354 = vmatpush.msra.mxu0 0.0
        %355 = vmatpush.msra.mxu0 0.0
        %356 = vmatpush.msra.mxu0 0.0
        %357 = vmatpush.msra.mxu0 0.0
        %358 = vmatpush.msra.mxu0 0.0
        %359 = vmatpush.msra.mxu0 0.0
        %360 = vmatpush.msra.mxu0 0.0
        %361 = vmatpush.msra.mxu0 0.0
        %362 = vmatpush.msra.mxu0 0.0
        %363 = vmatpush.msra.mxu0 0.0
        %364 = vmatpush.msra.mxu0 0.0
        %365 = vmatpush.msra.mxu0 0.0
        %366 = vmatpush.msra.mxu0 %v330
        %367 = vmatpush.msra.mxu0 %v315
        %368 = vmatmul.f32.gmra.mxu0 %v323
        %v369 = vpop.f32.mrf.mxu0
        %v370 = vadd.f32 %v320, %v369
        %371 = vdwg.mxu0
        %v374 = vrot.slane %v370, 7
        %vm375 = vcmask 1040384
        %v376 = vsel %vm375, %v350, %v374
        %v378 = vlaneseq
        %vm379 = vcmp.ge.s32.totalorder %v378, 0
        %vm380 = vcmp.lt.s32.totalorder %v378, 256
        %vm381 = vmand %vm379, %vm380
        %382 = vst.msk [vmem:[%s219] sm:$0x3] %vm381, %v376
        %s383 = sand.u32 %s138, 1
        %s384 = scalar_lea.sflag [#allocation4], %s383
        %s385 = sand.u32 %s138, 1
        %s386 = smul.addr %s385, 2
        %s387 = scalar_lea.vmem [#allocation3], %s386
        // Predicated region
        $region41: #{markov_net_forward.2} parent=39 // pred_check
          %p388 = pneg %p148
        $region42: #{markov_net_forward.2} parent=39 // pred_check_branch
          %390 = sbr.rel (%p388) target = $region44
        $region43: #{markov_net_forward.2} parent=39 // pred_region
          %s391 = smul.u32 2, %s20
          %393 = vsyncadd %s384, 0
          %s394 = scalar_lea.hbm %s5, %s391
          %s396 = sshll.u32 %s387, 4
          %s397 = int_to_ptr.vmem [resolvable:$true] %s396
          %s398 = sshll.u32 %s394, 4
          %s399 = int_to_ptr.hbm [resolvable:$true] %s398
          %401 = dma.vmem_to_hbm [thread:$0]  %s397, 32, %s399, %s384
        $region44: #{markov_net_forward.2} parent=39 // pred_fallthru
          _
      $region40: #{markov_net_forward.2} parent=5 // pred_fallthru
        _
      %p402 = scmp.le.s32.totalorder 2, %s15
      // Predicated region
      $region45: #{markov_net_forward.2} parent=5 // pred_check
        %p403 = pneg %p402
      $region46: #{markov_net_forward.2} parent=5 // pred_check_branch
        %405 = sbr.rel (%p403) target = $region48
      $region47: #{markov_net_forward.2} parent=5 // pred_region
        %s406 = ssub.s32 %s15, 2
        // Predicated region
        $region49: #{markov_net_forward.2} parent=47 // pred_check
          %p407 = pneg %p154
        $region50: #{markov_net_forward.2} parent=47 // pred_check_branch
          %409 = sbr.rel (%p407) target = $region52
        $region51: #{markov_net_forward.2} parent=47 // pred_region
          %s410 = sand.u32 %s139, 1
          %s411 = scalar_lea.sflag [#allocation4], %s410
          %s412 = sand.u32 %s139, 1
          %s413 = smul.addr %s412, 2
          %s414 = scalar_lea.vmem [#allocation3], %s413
          %416 = dma.done %s411, 32
        $region52: #{markov_net_forward.2} parent=47 // pred_fallthru
          _
      $region48: #{markov_net_forward.2} parent=5 // pred_fallthru
        _
    $region6: #{markov_net_forward.2} parent=1 // loop_footer
      %s19 = sadd.s32 1, %s15
    $region7: #{markov_net_forward.2} parent=1 // loop_footer_branch
      %14 = sbr.rel target = $region3
    $region8: #{markov_net_forward.2} parent=1 // loop_exit
      _
    %417 = vsyncpa [#allocation4], 1
    %s418 = scalar_lea.sflag [#allocation4], 1
    %419 = vsyncpa %s418, 1

</llo_original>
